<compile_context>
chip_gen: v5e
topology: v5e:2x2
jax: 0.10.0
libtpu: 0.0.40
codegen_flags: <defaults>
</compile_context>

<pallas_src>
import jax
import jax.numpy as jnp
from jax.experimental import pallas as pl
from jax.experimental.pallas import tpu as pltpu


def _rbf_product_kernel(params_ref, xy_ref, o_ref):
    """params_ref (SMEM, (5,) f32): [a_x*a_y, -1/c_x^2, -1/c_y^2, b_x, b_y].

    xy_ref: (2, 8, L) f32 block -- xy_ref[0] = x coords, xy_ref[1] = y coords.
    o_ref : (8, L) f32 block.
    """
    a_prod = params_ref[0]
    neg_inv_cx2 = params_ref[1]
    neg_inv_cy2 = params_ref[2]
    b_x = params_ref[3]
    b_y = params_ref[4]

    dx = xy_ref[0] - b_x          # (8, L)
    dy = xy_ref[1] - b_y          # (8, L)
    # a_x*exp(-dx^2/c_x^2) * a_y*exp(-dy^2/c_y^2)
    #   = (a_x*a_y) * exp(dx^2*(-1/c_x^2) + dy^2*(-1/c_y^2))   -- one exp/point
    o_ref[...] = a_prod * jnp.exp(dx * dx * neg_inv_cx2 + dy * dy * neg_inv_cy2)


def _fuse_params(params):
    # params layout: [a_x, c_x, b_x, a_y, c_y, b_y]
    a_x, c_x, b_x = params[0], params[1], params[2]
    a_y, c_y, b_y = params[3], params[4], params[5]
    return jnp.stack(
        [a_x * a_y, -1.0 / (c_x * c_x), -1.0 / (c_y * c_y), b_x, b_y]
    ).astype(jnp.float32)


def my_model_forward_soa(xy, params, *, block_lanes=64 * 1024):
    """SoA entry: xy is (2, Np) float32, Np % 8 == 0.  Row 0 = 'x', row 1 = 'y'.

    Returns (Np, 1) float32.  No wrapper-side copies (free reshapes only).
    """
    assert xy.ndim == 2 and xy.shape[0] == 2 and xy.shape[1] % 8 == 0
    n_points = xy.shape[1]
    n_lanes = n_points // 8

    fused = _fuse_params(params)
    xy3 = xy.astype(jnp.float32).reshape(2, 8, n_lanes)   # free reshape

    if n_lanes <= block_lanes:
        block_l = n_lanes                                  # one-shot: block == array
    else:
        block_l = max(128, (block_lanes // 128) * 128)     # lane-aligned tiles
    grid = (pl.cdiv(n_lanes, block_l),)                    # ragged tail masked

    out = pl.pallas_call(
        _rbf_product_kernel,
        out_shape=jax.ShapeDtypeStruct((8, n_lanes), jnp.float32),
        grid=grid,
        in_specs=[
            pl.BlockSpec(memory_space=pltpu.MemorySpace.SMEM),      # scalars
            pl.BlockSpec((2, 8, block_l), lambda i: (0, 0, i)),     # coords
        ],
        out_specs=pl.BlockSpec((8, block_l), lambda i: (0, i)),
        compiler_params=pltpu.CompilerParams(
            dimension_semantics=("parallel",),       # v7x: shard steps over 2 TCs
            vmem_limit_bytes=32 * 1024 * 1024,       # 2x(in+out) blocks + headroom
        ),
    )(fused, xy3)

    return out.reshape(n_points, 1)                         # free reshape


def my_model_forward(x, params, *, block_lanes=64 * 1024):
    """AoS entry matching the PyTorch module: x is (N, 2), columns ['x', 'y'].

    Returns (N, 1) float32.  Does exactly one AoS->SoA transpose pass.
    """
    n = x.shape[0]
    pad = (-n) % 8
    x = x.astype(jnp.float32)
    if pad:
        # Tiny (<8 row) pad so the SoA slab has 8 full sublanes; fused by XLA
        # into the transpose copy.  Padded coords stay finite; rows sliced off.
        x = jnp.pad(x, ((0, pad), (0, 0)))
    xy = x.T                                                # the single copy pass
    out = my_model_forward_soa(xy, params, block_lanes=block_lanes)
    return out[:n] if pad else out


def _reference(x, params):
    a_x, c_x, b_x = params[0], params[1], params[2]
    a_y, c_y, b_y = params[3], params[4], params[5]
    rx = a_x * jnp.exp(-((x[:, 0:1] - b_x) ** 2) / c_x ** 2)
    ry = a_y * jnp.exp(-((x[:, 1:2] - b_y) ** 2) / c_y ** 2)
    return rx * ry


if __name__ == "__main__":
    # myRBF init for both branches: a = -0.3 (param), b = 0.5 (buffer), c = 0.5.
    # params layout: [a_x, c_x, b_x, a_y, c_y, b_y]
    params = jnp.array([-0.3, 0.5, 0.5, -0.3, 0.5, 0.5], dtype=jnp.float32)

    key = jax.random.PRNGKey(0)
    k1, k2 = jax.random.split(key)

    # 1) Small point cloud, N % 8 == 0: one-shot block, no pad, no slice.
    N = 256
    x = jax.random.uniform(k1, (N, 2), dtype=jnp.float32)
    out = jax.block_until_ready(my_model_forward(x, params))
    ref = _reference(x, params)
    assert out.shape == (N, 1)
    assert jnp.allclose(out, ref, atol=1e-6, rtol=1e-5)

    # 2) N % 8 != 0 with a small block_lanes to force a multi-step parallel
    #    grid with a ragged (Pallas-masked) last block -- the same code path
    #    large point clouds take in production.
    N2 = 2500
    x2 = jax.random.uniform(k2, (N2, 2), dtype=jnp.float32)
    out2 = jax.block_until_ready(my_model_forward(x2, params, block_lanes=128))
    ref2 = _reference(x2, params)
    assert out2.shape == (N2, 1)
    assert jnp.allclose(out2, ref2, atol=1e-6, rtol=1e-5)

    # 3) SoA fast path (copy-free wrapper).
    xy_soa = x.T
    out3 = jax.block_until_ready(my_model_forward_soa(xy_soa, params))
    assert jnp.allclose(out3, ref, atol=1e-6, rtol=1e-5)

    print("KERNEL_OK")
</pallas_src>

<mosaic_0001>
module attributes {stable_mosaic.version = 11 : i64} {
  func.func @_rbf_product_kernel(%arg0: i32, %arg1: memref<5xf32, #tpu.memory_space<smem>>, %arg2: memref<2x8x32xf32, #tpu.memory_space<vmem>>, %arg3: memref<8x32xf32, #tpu.memory_space<vmem>>) attributes {dimension_semantics = [#tpu.dimension_semantics<parallel>], iteration_bounds = array<i64: 1>, scalar_prefetch = 0 : i64, scratch_operands = 0 : i64, tpu.core_type = #tpu.core_type<tc>, window_params = [{transform_indices = @transform_0, window_bounds = array<i64: 5>}, {transform_indices = @transform_1, window_bounds = array<i64: 2, 8, 32>}, {transform_indices = @transform_2, window_bounds = array<i64: 8, 32>}]} {
    %c0 = arith.constant 0 : index
    %0 = memref.load %arg1[%c0] : memref<5xf32, #tpu.memory_space<smem>>
    %c1 = arith.constant 1 : index
    %1 = memref.load %arg1[%c1] : memref<5xf32, #tpu.memory_space<smem>>
    %c2 = arith.constant 2 : index
    %2 = memref.load %arg1[%c2] : memref<5xf32, #tpu.memory_space<smem>>
    %c3 = arith.constant 3 : index
    %3 = memref.load %arg1[%c3] : memref<5xf32, #tpu.memory_space<smem>>
    %c4 = arith.constant 4 : index
    %4 = memref.load %arg1[%c4] : memref<5xf32, #tpu.memory_space<smem>>
    %c0_0 = arith.constant 0 : index
    %c0_1 = arith.constant 0 : index
    %c0_2 = arith.constant 0 : index
    %5 = vector.load %arg2[%c0_0, %c0_1, %c0_2] : memref<2x8x32xf32, #tpu.memory_space<vmem>>, vector<1x8x32xf32>
    %6 = vector.shape_cast %5 : vector<1x8x32xf32> to vector<8x32xf32>
    %7 = vector.broadcast %3 : f32 to vector<8x32xf32>
    %8 = arith.subf %6, %7 : vector<8x32xf32>
    %c1_3 = arith.constant 1 : index
    %c0_4 = arith.constant 0 : index
    %c0_5 = arith.constant 0 : index
    %9 = vector.load %arg2[%c1_3, %c0_4, %c0_5] : memref<2x8x32xf32, #tpu.memory_space<vmem>>, vector<1x8x32xf32>
    %10 = vector.shape_cast %9 : vector<1x8x32xf32> to vector<8x32xf32>
    %11 = vector.broadcast %4 : f32 to vector<8x32xf32>
    %12 = arith.subf %10, %11 : vector<8x32xf32>
    %13 = arith.mulf %8, %8 : vector<8x32xf32>
    %14 = vector.broadcast %1 : f32 to vector<8x32xf32>
    %15 = arith.mulf %13, %14 : vector<8x32xf32>
    %16 = arith.mulf %12, %12 : vector<8x32xf32>
    %17 = vector.broadcast %2 : f32 to vector<8x32xf32>
    %18 = arith.mulf %16, %17 : vector<8x32xf32>
    %19 = arith.addf %15, %18 : vector<8x32xf32>
    %20 = math.exp %19 : vector<8x32xf32>
    %21 = vector.broadcast %0 : f32 to vector<8x32xf32>
    %22 = arith.mulf %21, %20 : vector<8x32xf32>
    %c0_6 = arith.constant 0 : index
    %c0_7 = arith.constant 0 : index
    %23 = vector.load %arg3[%c0_6, %c0_7] : memref<8x32xf32, #tpu.memory_space<vmem>>, vector<8x32xf32>
    tpu.vector_store %arg3[%c0_6, %c0_7], %22 {strides = array<i32>} : memref<8x32xf32, #tpu.memory_space<vmem>>, vector<8x32xf32>,
    return
  }
  func.func @transform_0(%arg0: i32) -> i32 {
    %c0_i32 = arith.constant 0 : i32
    %c0_i32_0 = arith.constant 0 : i32
    return %c0_i32 : i32
  }
  func.func @transform_1(%arg0: i32) -> (i32, i32, i32) {
    %c0_i32 = arith.constant 0 : i32
    %c0_i32_0 = arith.constant 0 : i32
    %c0_i32_1 = arith.constant 0 : i32
    return %c0_i32, %c0_i32_0, %arg0 : i32, i32, i32
  }
  func.func @transform_2(%arg0: i32) -> (i32, i32) {
    %c0_i32 = arith.constant 0 : i32
    %c0_i32_0 = arith.constant 0 : i32
    return %c0_i32, %arg0 : i32, i32
  }
}

</mosaic_0001>

<llo_original>
// kernel: tpu_custom_call.1
$region0: #{tpu_custom_call.1}
  #allocation0 [shape = 'u32[]', space=smem, size = 0x4, offset = 0x4, fixed_abs, tag = 'smem constant byte address 0x4 - core index']
  #allocation1 [shape = 'u32[72,128]{1,0:T(1,128)}', space=vmem, size = 0x9000, scoped, tag = 'internal scratch']
  %s0 = inlined_call_operand.hbm [shape: f32[5], index: 0, kind: input, shape index: {}]
  %s1 = inlined_call_operand.hbm [shape: f32[2,8,32], index: 1, kind: input, shape index: {}]
  %s2 = inlined_call_operand.hbm [shape: f32[8,32], index: 2, kind: output, shape index: {}]
  %s3 = sld [smem:[#allocation0]]
  $region26: #{tpu_custom_call.1} parent=0
    _
  %s5 = ssub.s32 1, %s3
  %s6 = scalar_select 0, %s5, %s3
  $region1: #{tpu_custom_call.1} parent=0
    #allocation2 [shape = 'u8[512]{0}', space=smem, size = 0x200, scoped, tag = 'input window, operand 0, single buffered']
    #allocation3 [shape = 's32[1]{0}', space=sflag, size = 0x4, scoped, tag = 'scoped memory for tpu_custom_call.1']
    #allocation4 [shape = 's32[1]{0}', space=sflag, size = 0x4, scoped, tag = 'scoped memory for tpu_custom_call.1']
    #allocation5 [shape = 's32[1]{0}', space=sflag, size = 0x4, scoped, tag = 'scoped memory for tpu_custom_call.1']
    #allocation6 [shape = 'u8[8192]{0}', space=vmem, size = 0x2000, scoped, tag = 'input window, operand 1, single buffered']
    #allocation7 [shape = 'u8[4096]{0}', space=vmem, size = 0x1000, scoped, tag = 'output window, operand 0, single buffered']
    %7 = vsyncpa [#allocation5], 0
    %8 = vsyncpa [#allocation3], 0
    %9 = vsyncpa [#allocation4], 0
    // Predicated region
    $region2: #{tpu_custom_call.1} parent=1 // pred_check
      _
    $region3: #{tpu_custom_call.1} parent=1 // pred_check_branch
      %11 = sbr.rel (0) target = $region5
    $region4: #{tpu_custom_call.1} parent=1 // pred_region
      %13 = vsyncadd [#allocation5], 0
      %s15 = sshll.u32 %s0, 4
      %s16 = int_to_ptr.hbm [resolvable:$true] %s15
      %18 = dma.hbm_to_smem %s16, 16, [#allocation2], [#allocation5]
    $region5: #{tpu_custom_call.1} parent=1 // pred_fallthru
      _
    // Predicated region
    $region6: #{tpu_custom_call.1} parent=1 // pred_check
      _
    $region7: #{tpu_custom_call.1} parent=1 // pred_check_branch
      %20 = sbr.rel (0) target = $region9
    $region8: #{tpu_custom_call.1} parent=1 // pred_region
      %22 = vsyncadd [#allocation3], 0
      %s23 = sshll.u32 %s1, 4
      %s24 = int_to_ptr.hbm [resolvable:$true] %s23
      %s25 = sshll.u32 [#allocation6], 4
      %s26 = int_to_ptr.vmem [resolvable:$true] %s25
      %31 = dma.hbm_to_vmem [thread:$0]  %s24, 256, %s26, [#allocation3], 128, 128, 8
    $region9: #{tpu_custom_call.1} parent=1 // pred_fallthru
      _
    // Predicated region
    $region10: #{tpu_custom_call.1} parent=1 // pred_check
      _
    $region11: #{tpu_custom_call.1} parent=1 // pred_check_branch
      %33 = sbr.rel (0) target = $region13
    $region12: #{tpu_custom_call.1} parent=1 // pred_region
      %35 = dma.done [#allocation5], 16
    $region13: #{tpu_custom_call.1} parent=1 // pred_fallthru
      _
    // Predicated region
    $region14: #{tpu_custom_call.1} parent=1 // pred_check
      _
    $region15: #{tpu_custom_call.1} parent=1 // pred_check_branch
      %37 = sbr.rel (0) target = $region17
    $region16: #{tpu_custom_call.1} parent=1 // pred_region
      %39 = dma.done [#allocation3], 256
    $region17: #{tpu_custom_call.1} parent=1 // pred_fallthru
      _
    %40 = sfence
    %s41 = sld [smem:[#allocation2]]
    %s42 = sld [smem:[#allocation2 + $0x1]]
    %s43 = sld [smem:[#allocation2 + $0x2]]
    %s44 = sld [smem:[#allocation2 + $0x3]]
    %s45 = sld [smem:[#allocation2 + $0x4]]
    %v46 = vld [vmem:[#allocation6] sm:$0xff]
    %v47 = vstv %s44
    %v48 = vsub.f32 %v46, %v47
    %s49 = scalar_lea.vmem [#allocation6], 8
    %v50 = vld [vmem:[%s49] sm:$0xff]
    %v51 = vstv %s45
    %v52 = vsub.f32 %v50, %v51
    %v53 = vmul.f32 %v48, %v48
    %v54 = vstv %s42
    %v55 = vmul.f32 %v53, %v54
    %v56 = vmul.f32 %v52, %v52
    %v57 = vstv %s43
    %v58 = vmul.f32 %v56, %v57
    %v59 = vadd.f32 %v55, %v58
    %v60 = vmul.f32 %v59, 1.442695
    %v61 = vpow.pop %v60
    %v62 = vstv %s41
    %v63 = vmul.f32 %v62, %v61
    %vm64 = vcmask 261120
    %65 = vst.msk [vmem:[#allocation7] sm:$0xff] %vm64, %v63
    // Predicated region
    $region18: #{tpu_custom_call.1} parent=1 // pred_check
      _
    $region19: #{tpu_custom_call.1} parent=1 // pred_check_branch
      %67 = sbr.rel (0) target = $region21
    $region20: #{tpu_custom_call.1} parent=1 // pred_region
      %69 = vsyncadd [#allocation4], 0
      %s71 = sshll.u32 [#allocation7], 4
      %s72 = int_to_ptr.vmem [resolvable:$true] %s71
      %s73 = sshll.u32 %s2, 4
      %s74 = int_to_ptr.hbm [resolvable:$true] %s73
      %76 = dma.vmem_to_hbm [thread:$0]  %s72, 128, %s74, [#allocation4]
    $region21: #{tpu_custom_call.1} parent=1 // pred_fallthru
      _
    // Predicated region
    $region22: #{tpu_custom_call.1} parent=1 // pred_check
      _
    $region23: #{tpu_custom_call.1} parent=1 // pred_check_branch
      %78 = sbr.rel (0) target = $region25
    $region24: #{tpu_custom_call.1} parent=1 // pred_region
      %80 = dma.done [#allocation4], 128
    $region25: #{tpu_custom_call.1} parent=1 // pred_fallthru
      _
    %81 = vsyncpa [#allocation3], 1
    %82 = vsyncpa [#allocation4], 1
    %83 = vsyncpa [#allocation5], 1

</llo_original>
